<compile_context>
chip_gen: v6e
topology: v6e:2x2x1
jax: 0.10.0
libtpu: 0.0.40
codegen_flags: <defaults>
</compile_context>

<pallas_src>
from functools import partial

import jax
import jax.numpy as jnp
from jax.experimental import pallas as pl
from jax.experimental.pallas import tpu as pltpu


# ----------------------------------------------------------------------------
# Pallas kernels
# ----------------------------------------------------------------------------

def _stats_kernel(x_ref, sum_ref, sq_ref):
    """Per-(sample, channel) spatial sum and sum-of-squares, accumulated over
    lane-tiles of the spatial axis."""
    @pl.when(pl.program_id(1) == 0)
    def _init():
        sum_ref[...] = jnp.zeros_like(sum_ref)
        sq_ref[...] = jnp.zeros_like(sq_ref)

    x = x_ref[...]                                        # (C, THW) lane-dense
    sum_ref[...] += jnp.sum(x, axis=1, keepdims=True)     # (C, 1)
    sq_ref[...] += jnp.sum(x * x, axis=1, keepdims=True)  # (C, 1)


def _gate_fold_kernel(sum_ref, sq_ref, w_ref, gamma_ref, beta_ref,
                      rmean_ref, rvar_ref, scale_ref, bias_ref,
                      *, inv_hw, inv_nhw, eps, training):
    """Tiny fused kernel: GAP -> FC (1x1 conv, no bias) -> sigmoid gate, BN
    statistics -> affine fold, and gate folded into per-sample scale/bias."""
    s = sum_ref[...]                                      # (N, C) spatial sums
    q = sq_ref[...]                                       # (N, C) sums of squares

    gap = s * inv_hw                                      # AdaptiveAvgPool2d((1,1))
    gate = jax.nn.sigmoid(                                # (N, Co)
        jnp.dot(gap, w_ref[...], preferred_element_type=jnp.float32))

    if training:                                          # PyTorch train-mode BN
        mean = jnp.sum(s, axis=0, keepdims=True) * inv_nhw            # (1, C)
        var = jnp.sum(q, axis=0, keepdims=True) * inv_nhw - mean * mean
    else:                                                 # eval mode: running stats
        mean = rmean_ref[...]
        var = rvar_ref[...]

    scale = gamma_ref[...] * jax.lax.rsqrt(var + eps)     # (1, C)
    bias = beta_ref[...] - mean * scale                   # (1, C)

    scale_ref[...] = scale * gate                         # (N, C) gate ⊙ BN-scale
    bias_ref[...] = bias * gate                           # (N, C) gate ⊙ BN-bias


def _apply_kernel(x_ref, scale_ref, bias_ref, o_ref):
    """out = bn(x) * gate, fully folded into one per-sample channel affine."""
    o_ref[...] = x_ref[...] * scale_ref[...] + bias_ref[...]   # (C,1) lane-bcast


# ----------------------------------------------------------------------------
# Wrapper
# ----------------------------------------------------------------------------

def _spatial_tile(hw, c, max_block_bytes=2 << 20):
    """Largest lane-tile THW dividing hw with a (C, THW) f32 block <= ~2 MiB
    (comfortable double-buffered VMEM headroom on v5e/v6e/v7x)."""
    cap = max(128, max_block_bytes // (4 * c))
    if hw <= cap:
        return hw
    t = (cap // 128) * 128
    while t >= 128:
        if hw % t == 0:
            return t
        t -= 128
    # TODO(synk): ragged spatial tiling not implemented; fall back to full extent.
    return hw


def sse_block_fwd(params, x_nchw, *, training=True, eps=1e-5):
    x = x_nchw.astype(jnp.float32)
    N, C, H, W = x.shape
    Co, Ci = params["fc_w"].shape[:2]
    # torch.mul(bn, gate) broadcast requires out_planes == in_planes (or 1).
    assert Ci == C and Co in (C, 1)
    HW = H * W
    x3 = x.reshape(N, C, HW)                      # spatial on the lane axis
    THW = _spatial_tile(HW, C)
    grid = (N, HW // THW)

    # Pass 1: per-(n, c) spatial sum / sum-of-squares.
    sums, sqs = pl.pallas_call(
        _stats_kernel,
        out_shape=(jax.ShapeDtypeStruct((N, C, 1), jnp.float32),
                   jax.ShapeDtypeStruct((N, C, 1), jnp.float32)),
        grid=grid,
        in_specs=[pl.BlockSpec((None, C, THW), lambda n, h: (n, h, 0))],
        out_specs=(pl.BlockSpec((None, C, 1), lambda n, h: (n, 0, 0)),
                   pl.BlockSpec((None, C, 1), lambda n, h: (n, 0, 0))),
        compiler_params=pltpu.CompilerParams(
            dimension_semantics=("parallel", "arbitrary")),
    )(x3)

    # Pass 2 (tiny): fused GAP -> FC -> sigmoid + BN fold + gate fold.
    wm = params["fc_w"][:, :, 0, 0].T.astype(jnp.float32)          # (Cin, Cout)
    row = lambda v: v.reshape(1, C).astype(jnp.float32)
    s_nc, b_nc = pl.pallas_call(
        partial(_gate_fold_kernel, inv_hw=1.0 / HW, inv_nhw=1.0 / (N * HW),
                eps=eps, training=training),
        out_shape=(jax.ShapeDtypeStruct((N, C), jnp.float32),
                   jax.ShapeDtypeStruct((N, C), jnp.float32)),
    )(sums.reshape(N, C), sqs.reshape(N, C), wm,
      row(params["gamma"]), row(params["beta"]),
      row(params["running_mean"]), row(params["running_var"]))

    # Pass 3: single fused FMA apply (lane-dense, both grid axes parallel).
    out3 = pl.pallas_call(
        _apply_kernel,
        out_shape=jax.ShapeDtypeStruct((N, C, HW), jnp.float32),
        grid=grid,
        in_specs=[pl.BlockSpec((None, C, THW), lambda n, h: (n, h, 0)),
                  pl.BlockSpec((None, C, 1), lambda n, h: (n, 0, 0)),
                  pl.BlockSpec((None, C, 1), lambda n, h: (n, 0, 0))],
        out_specs=pl.BlockSpec((None, C, THW), lambda n, h: (n, h, 0)),
        compiler_params=pltpu.CompilerParams(
            dimension_semantics=("parallel", "parallel")),
    )(x3, s_nc.reshape(N, C, 1), b_nc.reshape(N, C, 1))

    return out3.reshape(N, C, H, W)


# ----------------------------------------------------------------------------
# Pure-JAX reference (mirrors PyTorch SSEBlock.forward)
# ----------------------------------------------------------------------------

def sse_block_ref(params, x, *, training=True, eps=1e-5):
    gamma = params["gamma"][None, :, None, None]
    beta = params["beta"][None, :, None, None]
    if training:
        mean = jnp.mean(x, axis=(0, 2, 3))
        var = jnp.var(x, axis=(0, 2, 3))           # biased, as torch BN forward
    else:
        mean, var = params["running_mean"], params["running_var"]
    bn = (x - mean[None, :, None, None]) * jax.lax.rsqrt(
        var[None, :, None, None] + eps) * gamma + beta
    gap = jnp.mean(x, axis=(2, 3))                                  # (N, C)
    gate = jax.nn.sigmoid(gap @ params["fc_w"][:, :, 0, 0].T)       # (N, Co)
    return bn * gate[:, :, None, None]


# ----------------------------------------------------------------------------

if __name__ == "__main__":
    key = jax.random.PRNGKey(0)
    kx, kg, kb, km, kv, kw = jax.random.split(key, 6)

    N, C, H, W = 2, 32, 16, 16                     # in_planes == out_planes == 32
    params = dict(
        gamma=(1.0 + 0.1 * jax.random.normal(kg, (C,))).astype(jnp.float32),
        beta=(0.1 * jax.random.normal(kb, (C,))).astype(jnp.float32),
        running_mean=(0.1 * jax.random.normal(km, (C,))).astype(jnp.float32),
        running_var=(0.5 + jax.random.uniform(kv, (C,))).astype(jnp.float32),
        fc_w=(0.1 * jax.random.normal(kw, (C, C, 1, 1))).astype(jnp.float32),
    )
    x = jax.random.normal(kx, (N, C, H, W), dtype=jnp.float32)

    for training in (True, False):                 # train-mode (default) + eval
        out = jax.jit(partial(sse_block_fwd, training=training))(params, x)
        out = jax.block_until_ready(out)
        ref = sse_block_ref(params, x, training=training)
        assert out.shape == (N, C, H, W)
        assert bool(jnp.all(jnp.isfinite(out)))
        assert bool(jnp.allclose(out, ref, atol=1e-4, rtol=1e-4)), \
            float(jnp.max(jnp.abs(out - ref)))

    print("KERNEL_OK")
</pallas_src>

<mosaic_0001>
module attributes {stable_mosaic.version = 11 : i64} {
  func.func @_stats_kernel(%arg0: i32, %arg1: i32, %arg2: memref<1x32x256xf32, #tpu.memory_space<vmem>>, %arg3: memref<1x32x1xf32, #tpu.memory_space<vmem>>, %arg4: memref<1x32x1xf32, #tpu.memory_space<vmem>>) attributes {dimension_semantics = [#tpu.dimension_semantics<parallel>, #tpu.dimension_semantics<arbitrary>], iteration_bounds = array<i64: 2, 1>, scalar_prefetch = 0 : i64, scratch_operands = 0 : i64, tpu.core_type = #tpu.core_type<tc>, window_params = [{transform_indices = @transform_0, window_bounds = array<i64: 1, 32, 256>}, {transform_indices = @transform_1, window_bounds = array<i64: 1, 32, 1>}, {transform_indices = @transform_2, window_bounds = array<i64: 1, 32, 1>}]} {
    %c0_i32 = arith.constant 0 : i32
    %0 = arith.cmpi eq, %arg1, %c0_i32 : i32
    %1 = arith.extui %0 : i1 to i32
    %c0_i32_0 = arith.constant 0 : i32
    %2 = arith.cmpi ne, %1, %c0_i32_0 : i32
    scf.if %2 {
      %cst_16 = arith.constant 0.000000e+00 : f32
      %22 = vector.broadcast %cst_16 : f32 to vector<32x1xf32>
      %c0_17 = arith.constant 0 : index
      %c0_18 = arith.constant 0 : index
      %c0_19 = arith.constant 0 : index
      %23 = vector.load %arg3[%c0_17, %c0_18, %c0_19] : memref<1x32x1xf32, #tpu.memory_space<vmem>>, vector<1x32x1xf32>
      %24 = vector.shape_cast %23 : vector<1x32x1xf32> to vector<32x1xf32>
      %25 = vector.shape_cast %22 : vector<32x1xf32> to vector<1x32x1xf32>
      tpu.vector_store %arg3[%c0_17, %c0_18, %c0_19], %25 {strides = array<i32>} : memref<1x32x1xf32, #tpu.memory_space<vmem>>, vector<1x32x1xf32>,
      %cst_20 = arith.constant 0.000000e+00 : f32
      %26 = vector.broadcast %cst_20 : f32 to vector<32x1xf32>
      %c0_21 = arith.constant 0 : index
      %c0_22 = arith.constant 0 : index
      %c0_23 = arith.constant 0 : index
      %27 = vector.load %arg4[%c0_21, %c0_22, %c0_23] : memref<1x32x1xf32, #tpu.memory_space<vmem>>, vector<1x32x1xf32>
      %28 = vector.shape_cast %27 : vector<1x32x1xf32> to vector<32x1xf32>
      %29 = vector.shape_cast %26 : vector<32x1xf32> to vector<1x32x1xf32>
      tpu.vector_store %arg4[%c0_21, %c0_22, %c0_23], %29 {strides = array<i32>} : memref<1x32x1xf32, #tpu.memory_space<vmem>>, vector<1x32x1xf32>,
    } else {
    }
    %c0 = arith.constant 0 : index
    %c0_1 = arith.constant 0 : index
    %c0_2 = arith.constant 0 : index
    %3 = vector.load %arg2[%c0, %c0_1, %c0_2] : memref<1x32x256xf32, #tpu.memory_space<vmem>>, vector<1x32x256xf32>
    %4 = vector.shape_cast %3 : vector<1x32x256xf32> to vector<32x256xf32>
    %c0_3 = arith.constant 0 : index
    %c0_4 = arith.constant 0 : index
    %c0_5 = arith.constant 0 : index
    %5 = vector.load %arg3[%c0_3, %c0_4, %c0_5] : memref<1x32x1xf32, #tpu.memory_space<vmem>>, vector<1x32x1xf32>
    %6 = vector.shape_cast %5 : vector<1x32x1xf32> to vector<32x1xf32>
    %cst = arith.constant dense<0.000000e+00> : vector<32xf32>
    %7 = vector.multi_reduction <add>, %4, %cst [1] : vector<32x256xf32> to vector<32xf32>
    %8 = vector.shape_cast %7 : vector<32xf32> to vector<32x1xf32>
    %9 = arith.addf %6, %8 : vector<32x1xf32>
    %c0_6 = arith.constant 0 : index
    %c0_7 = arith.constant 0 : index
    %c0_8 = arith.constant 0 : index
    %10 = vector.load %arg3[%c0_6, %c0_7, %c0_8] : memref<1x32x1xf32, #tpu.memory_space<vmem>>, vector<1x32x1xf32>
    %11 = vector.shape_cast %10 : vector<1x32x1xf32> to vector<32x1xf32>
    %12 = vector.shape_cast %9 : vector<32x1xf32> to vector<1x32x1xf32>
    tpu.vector_store %arg3[%c0_6, %c0_7, %c0_8], %12 {strides = array<i32>} : memref<1x32x1xf32, #tpu.memory_space<vmem>>, vector<1x32x1xf32>,
    %c0_9 = arith.constant 0 : index
    %c0_10 = arith.constant 0 : index
    %c0_11 = arith.constant 0 : index
    %13 = vector.load %arg4[%c0_9, %c0_10, %c0_11] : memref<1x32x1xf32, #tpu.memory_space<vmem>>, vector<1x32x1xf32>
    %14 = vector.shape_cast %13 : vector<1x32x1xf32> to vector<32x1xf32>
    %15 = arith.mulf %4, %4 : vector<32x256xf32>
    %cst_12 = arith.constant dense<0.000000e+00> : vector<32xf32>
    %16 = vector.multi_reduction <add>, %15, %cst_12 [1] : vector<32x256xf32> to vector<32xf32>
    %17 = vector.shape_cast %16 : vector<32xf32> to vector<32x1xf32>
    %18 = arith.addf %14, %17 : vector<32x1xf32>
    %c0_13 = arith.constant 0 : index
    %c0_14 = arith.constant 0 : index
    %c0_15 = arith.constant 0 : index
    %19 = vector.load %arg4[%c0_13, %c0_14, %c0_15] : memref<1x32x1xf32, #tpu.memory_space<vmem>>, vector<1x32x1xf32>
    %20 = vector.shape_cast %19 : vector<1x32x1xf32> to vector<32x1xf32>
    %21 = vector.shape_cast %18 : vector<32x1xf32> to vector<1x32x1xf32>
    tpu.vector_store %arg4[%c0_13, %c0_14, %c0_15], %21 {strides = array<i32>} : memref<1x32x1xf32, #tpu.memory_space<vmem>>, vector<1x32x1xf32>,
    return
  }
  func.func @transform_0(%arg0: i32, %arg1: i32) -> (i32, i32, i32) {
    %c0_i32 = arith.constant 0 : i32
    %c0_i32_0 = arith.constant 0 : i32
    return %arg0, %arg1, %c0_i32 : i32, i32, i32
  }
  func.func @transform_1(%arg0: i32, %arg1: i32) -> (i32, i32, i32) {
    %c0_i32 = arith.constant 0 : i32
    %c0_i32_0 = arith.constant 0 : i32
    %c0_i32_1 = arith.constant 0 : i32
    return %arg0, %c0_i32, %c0_i32_0 : i32, i32, i32
  }
  func.func @transform_2(%arg0: i32, %arg1: i32) -> (i32, i32, i32) {
    %c0_i32 = arith.constant 0 : i32
    %c0_i32_0 = arith.constant 0 : i32
    %c0_i32_1 = arith.constant 0 : i32
    return %arg0, %c0_i32, %c0_i32_0 : i32, i32, i32
  }
}

module attributes {stable_mosaic.version = 11 : i64} {
  func.func @_gate_fold_kernel(%arg0: memref<2x32xf32, #tpu.memory_space<vmem>>, %arg1: memref<2x32xf32, #tpu.memory_space<vmem>>, %arg2: memref<32x32xf32, #tpu.memory_space<vmem>>, %arg3: memref<1x32xf32, #tpu.memory_space<vmem>>, %arg4: memref<1x32xf32, #tpu.memory_space<vmem>>, %arg5: memref<1x32xf32, #tpu.memory_space<vmem>>, %arg6: memref<1x32xf32, #tpu.memory_space<vmem>>, %arg7: memref<2x32xf32, #tpu.memory_space<vmem>>, %arg8: memref<2x32xf32, #tpu.memory_space<vmem>>) attributes {dimension_semantics = [], scalar_prefetch = 0 : i64, scratch_operands = 0 : i64, tpu.core_type = #tpu.core_type<tc>} {
    %c0 = arith.constant 0 : index
    %c0_0 = arith.constant 0 : index
    %0 = vector.load %arg0[%c0, %c0_0] : memref<2x32xf32, #tpu.memory_space<vmem>>, vector<2x32xf32>
    %c0_1 = arith.constant 0 : index
    %c0_2 = arith.constant 0 : index
    %1 = vector.load %arg1[%c0_1, %c0_2] : memref<2x32xf32, #tpu.memory_space<vmem>>, vector<2x32xf32>
    %cst = arith.constant 3.906250e-03 : f32
    %2 = vector.broadcast %cst : f32 to vector<2x32xf32>
    %3 = arith.mulf %0, %2 : vector<2x32xf32>
    %c0_3 = arith.constant 0 : index
    %c0_4 = arith.constant 0 : index
    %4 = vector.load %arg2[%c0_3, %c0_4] : memref<32x32xf32, #tpu.memory_space<vmem>>, vector<32x32xf32>
    %cst_5 = arith.constant dense<0.000000e+00> : vector<2x32xf32>
    %5 = tpu.matmul %3, %4, %cst_5 {dimension_numbers = #tpu.dot_dimension_numbers<[1], [0], [0], [1], [0, 0, 1, 1], [], []>} : vector<2x32xf32>, vector<32x32xf32>, vector<2x32xf32> -> vector<2x32xf32>
    %6 = arith.negf %5 : vector<2x32xf32>
    %7 = math.exp %6 : vector<2x32xf32>
    %cst_6 = arith.constant 1.000000e+00 : f32
    %8 = vector.broadcast %cst_6 : f32 to vector<2x32xf32>
    %9 = arith.addf %8, %7 : vector<2x32xf32>
    %10 = arith.divf %8, %9 : vector<2x32xf32>
    %cst_7 = arith.constant dense<0.000000e+00> : vector<32xf32>
    %11 = vector.multi_reduction <add>, %0, %cst_7 [0] : vector<2x32xf32> to vector<32xf32>
    %12 = vector.shape_cast %11 : vector<32xf32> to vector<1x32xf32>
    %cst_8 = arith.constant 0.001953125 : f32
    %13 = vector.broadcast %cst_8 : f32 to vector<1x32xf32>
    %14 = arith.mulf %12, %13 : vector<1x32xf32>
    %cst_9 = arith.constant dense<0.000000e+00> : vector<32xf32>
    %15 = vector.multi_reduction <add>, %1, %cst_9 [0] : vector<2x32xf32> to vector<32xf32>
    %16 = vector.shape_cast %15 : vector<32xf32> to vector<1x32xf32>
    %cst_10 = arith.constant 0.001953125 : f32
    %17 = vector.broadcast %cst_10 : f32 to vector<1x32xf32>
    %18 = arith.mulf %16, %17 : vector<1x32xf32>
    %19 = arith.mulf %14, %14 : vector<1x32xf32>
    %20 = arith.subf %18, %19 : vector<1x32xf32>
    %c0_11 = arith.constant 0 : index
    %c0_12 = arith.constant 0 : index
    %21 = vector.load %arg3[%c0_11, %c0_12] : memref<1x32xf32, #tpu.memory_space<vmem>>, vector<1x32xf32>
    %cst_13 = arith.constant 9.99999974E-6 : f32
    %22 = vector.broadcast %cst_13 : f32 to vector<1x32xf32>
    %23 = arith.addf %20, %22 : vector<1x32xf32>
    %24 = math.rsqrt %23 : vector<1x32xf32>
    %25 = arith.mulf %21, %24 : vector<1x32xf32>
    %c0_14 = arith.constant 0 : index
    %c0_15 = arith.constant 0 : index
    %26 = vector.load %arg4[%c0_14, %c0_15] : memref<1x32xf32, #tpu.memory_space<vmem>>, vector<1x32xf32>
    %27 = arith.mulf %14, %25 : vector<1x32xf32>
    %28 = arith.subf %26, %27 : vector<1x32xf32>
    %29 = vector.broadcast %25 : vector<1x32xf32> to vector<2x32xf32>
    %30 = arith.mulf %29, %10 : vector<2x32xf32>
    %c0_16 = arith.constant 0 : index
    %c0_17 = arith.constant 0 : index
    %31 = vector.load %arg7[%c0_16, %c0_17] : memref<2x32xf32, #tpu.memory_space<vmem>>, vector<2x32xf32>
    tpu.vector_store %arg7[%c0_16, %c0_17], %30 {strides = array<i32>} : memref<2x32xf32, #tpu.memory_space<vmem>>, vector<2x32xf32>,
    %32 = vector.broadcast %28 : vector<1x32xf32> to vector<2x32xf32>
    %33 = arith.mulf %32, %10 : vector<2x32xf32>
    %c0_18 = arith.constant 0 : index
    %c0_19 = arith.constant 0 : index
    %34 = vector.load %arg8[%c0_18, %c0_19] : memref<2x32xf32, #tpu.memory_space<vmem>>, vector<2x32xf32>
    tpu.vector_store %arg8[%c0_18, %c0_19], %33 {strides = array<i32>} : memref<2x32xf32, #tpu.memory_space<vmem>>, vector<2x32xf32>,
    return
  }
}

module attributes {stable_mosaic.version = 11 : i64} {
  func.func @_apply_kernel(%arg0: i32, %arg1: i32, %arg2: memref<1x32x256xf32, #tpu.memory_space<vmem>>, %arg3: memref<1x32x1xf32, #tpu.memory_space<vmem>>, %arg4: memref<1x32x1xf32, #tpu.memory_space<vmem>>, %arg5: memref<1x32x256xf32, #tpu.memory_space<vmem>>) attributes {dimension_semantics = [#tpu.dimension_semantics<parallel>, #tpu.dimension_semantics<parallel>], iteration_bounds = array<i64: 2, 1>, scalar_prefetch = 0 : i64, scratch_operands = 0 : i64, tpu.core_type = #tpu.core_type<tc>, window_params = [{transform_indices = @transform_0, window_bounds = array<i64: 1, 32, 256>}, {transform_indices = @transform_1, window_bounds = array<i64: 1, 32, 1>}, {transform_indices = @transform_2, window_bounds = array<i64: 1, 32, 1>}, {transform_indices = @transform_3, window_bounds = array<i64: 1, 32, 256>}]} {
    %c0 = arith.constant 0 : index
    %c0_0 = arith.constant 0 : index
    %c0_1 = arith.constant 0 : index
    %0 = vector.load %arg2[%c0, %c0_0, %c0_1] : memref<1x32x256xf32, #tpu.memory_space<vmem>>, vector<1x32x256xf32>
    %1 = vector.shape_cast %0 : vector<1x32x256xf32> to vector<32x256xf32>
    %c0_2 = arith.constant 0 : index
    %c0_3 = arith.constant 0 : index
    %c0_4 = arith.constant 0 : index
    %2 = vector.load %arg3[%c0_2, %c0_3, %c0_4] : memref<1x32x1xf32, #tpu.memory_space<vmem>>, vector<1x32x1xf32>
    %3 = vector.shape_cast %2 : vector<1x32x1xf32> to vector<32x1xf32>
    %4 = vector.broadcast %3 : vector<32x1xf32> to vector<32x256xf32>
    %5 = arith.mulf %1, %4 : vector<32x256xf32>
    %c0_5 = arith.constant 0 : index
    %c0_6 = arith.constant 0 : index
    %c0_7 = arith.constant 0 : index
    %6 = vector.load %arg4[%c0_5, %c0_6, %c0_7] : memref<1x32x1xf32, #tpu.memory_space<vmem>>, vector<1x32x1xf32>
    %7 = vector.shape_cast %6 : vector<1x32x1xf32> to vector<32x1xf32>
    %8 = vector.broadcast %7 : vector<32x1xf32> to vector<32x256xf32>
    %9 = arith.addf %5, %8 : vector<32x256xf32>
    %c0_8 = arith.constant 0 : index
    %c0_9 = arith.constant 0 : index
    %c0_10 = arith.constant 0 : index
    %10 = vector.load %arg5[%c0_8, %c0_9, %c0_10] : memref<1x32x256xf32, #tpu.memory_space<vmem>>, vector<1x32x256xf32>
    %11 = vector.shape_cast %10 : vector<1x32x256xf32> to vector<32x256xf32>
    %12 = vector.shape_cast %9 : vector<32x256xf32> to vector<1x32x256xf32>
    tpu.vector_store %arg5[%c0_8, %c0_9, %c0_10], %12 {strides = array<i32>} : memref<1x32x256xf32, #tpu.memory_space<vmem>>, vector<1x32x256xf32>,
    return
  }
  func.func @transform_0(%arg0: i32, %arg1: i32) -> (i32, i32, i32) {
    %c0_i32 = arith.constant 0 : i32
    %c0_i32_0 = arith.constant 0 : i32
    return %arg0, %arg1, %c0_i32 : i32, i32, i32
  }
  func.func @transform_1(%arg0: i32, %arg1: i32) -> (i32, i32, i32) {
    %c0_i32 = arith.constant 0 : i32
    %c0_i32_0 = arith.constant 0 : i32
    %c0_i32_1 = arith.constant 0 : i32
    return %arg0, %c0_i32, %c0_i32_0 : i32, i32, i32
  }
  func.func @transform_2(%arg0: i32, %arg1: i32) -> (i32, i32, i32) {
    %c0_i32 = arith.constant 0 : i32
    %c0_i32_0 = arith.constant 0 : i32
    %c0_i32_1 = arith.constant 0 : i32
    return %arg0, %c0_i32, %c0_i32_0 : i32, i32, i32
  }
  func.func @transform_3(%arg0: i32, %arg1: i32) -> (i32, i32, i32) {
    %c0_i32 = arith.constant 0 : i32
    %c0_i32_0 = arith.constant 0 : i32
    return %arg0, %arg1, %c0_i32 : i32, i32, i32
  }
}

</mosaic_0001>

<llo_original>
// kernel: sse_block_fwd.3
$region0: #{sse_block_fwd.3}
  #allocation0 [shape = 'u32[]', space=smem, size = 0x4, offset = 0x4, fixed_abs, tag = 'smem constant byte address 0x4 - core index']
  #allocation1 [shape = 'u32[144,128]{1,0:T(1,128)}', space=vmem, size = 0x12000, scoped, tag = 'internal scratch']
  %s0 = inlined_call_operand.vmem [shape: f32[2,32,256], index: 0, kind: input, shape index: {}]
  %s1 = inlined_call_operand.vmem [shape: f32[2,32,1], index: 1, kind: output, shape index: {0}]
  %s2 = inlined_call_operand.vmem [shape: f32[2,32,1], index: 2, kind: output, shape index: {1}]
  %3 = xla_tuple %s1, %s2
  %s4 = sld [smem:[#allocation0]]
  $region49: #{sse_block_fwd.3} parent=0
    _
  %s6 = ssub.s32 1, %s4
  %s7 = scalar_select 0, %s6, %s4
  loop: start=0, step=1, limit=4
  $region2: #{sse_block_fwd.3} parent=0 // loop_pre_header
    _
  $region3: #{sse_block_fwd.3} parent=0 // loop_header
    %s9 = sphi 0, %s13
    %p10 = scmp.ge.s32.totalorder %s9, 4
    %s16 = sphi 0, %s28
    %s17 = sphi 0, %s24
    %s18 = sphi 0, %s16
    %s19 = sphi 0, %s17
    %s20 = sphi 0, %s18
    %s21 = sphi 0, %s19
    %s33 = sphi 0, %s35
    %s36 = sphi 0, %s33
    %s37 = sphi 0, %s36
    %s53 = sphi 0, %s37
    %s59 = sphi 0, %s61
    %s62 = sphi 0, %s59
    %s63 = sphi 0, %s62
    %s79 = sphi 0, %s63
    %s85 = sphi 0, %s87
    %s88 = sphi 0, %s85
    %s89 = sphi 0, %s88
    %s105 = sphi 0, %s89
  $region4: #{sse_block_fwd.3} parent=0 // loop_header_branch
    %12 = sbr.rel (%p10) target = $region8
  $region5: #{sse_block_fwd.3} parent=0 // loop_body
    %s14 = ssub.s32 %s9, 1
    %s15 = ssub.s32 %s9, 2
    %s22 = sadd.s32 1, %s17
    %p23 = scmp.ge.s32.totalorder %s22, 1
    %s24 = scalar_select %p23, 0, %s22
    %s25 = sadd.s32 1, %s16
    %s26 = scalar_select %p23, %s25, %s16
    %p27 = scmp.ge.s32.totalorder %s26, 2
    %s28 = scalar_select %p27, 0, %s26
    %s29 = ssub.s32 %s16, %s28
    %s30 = ssub.s32 %s17, %s24
    %s31 = sor.u32 %s29, %s30
    %p32 = scmp.eq.s32.totalorder %s31, 0
    %s34 = sadd.s32 %s33, 1
    %s35 = scalar_select %p32, %s33, %s34
    %p38 = pneg %p32
    %p39 = scmp.eq.s32.totalorder %s9, 1
    %p40 = por %p38, %p39
    %p41 = scmp.ne.s32.totalorder %s33, %s36
    %p42 = scmp.eq.s32.totalorder %s9, 0
    %p43 = por %p41, %p42
    %p44 = scmp.ne.s32.totalorder %s33, %s36
    %p45 = scmp.eq.s32.totalorder %s14, 1
    %p46 = por %p44, %p45
    %p47 = scmp.ne.s32.totalorder %s36, %s37
    %p48 = scmp.eq.s32.totalorder %s14, 0
    %p49 = por %p47, %p48
    %p50 = scmp.ne.s32.totalorder %s36, %s37
    %p51 = scmp.eq.s32.totalorder %s15, 1
    %p52 = por %p50, %p51
    %p54 = scmp.ne.s32.totalorder %s37, %s53
    %p55 = scmp.eq.s32.totalorder %s15, 0
    %p56 = por %p54, %p55
    %s57 = ssub.s32 %s16, %s28
    %p58 = scmp.eq.s32.totalorder %s57, 0
    %s60 = sadd.s32 %s59, 1
    %s61 = scalar_select %p58, %s59, %s60
    %p64 = pneg %p58
    %p65 = scmp.eq.s32.totalorder %s9, 1
    %p66 = por %p64, %p65
    %p67 = scmp.ne.s32.totalorder %s59, %s62
    %p68 = scmp.eq.s32.totalorder %s9, 0
    %p69 = por %p67, %p68
    %p70 = scmp.ne.s32.totalorder %s59, %s62
    %p71 = scmp.eq.s32.totalorder %s14, 1
    %p72 = por %p70, %p71
    %p73 = scmp.ne.s32.totalorder %s62, %s63
    %p74 = scmp.eq.s32.totalorder %s14, 0
    %p75 = por %p73, %p74
    %p76 = scmp.ne.s32.totalorder %s62, %s63
    %p77 = scmp.eq.s32.totalorder %s15, 1
    %p78 = por %p76, %p77
    %p80 = scmp.ne.s32.totalorder %s63, %s79
    %p81 = scmp.eq.s32.totalorder %s15, 0
    %p82 = por %p80, %p81
    %s83 = ssub.s32 %s16, %s28
    %p84 = scmp.eq.s32.totalorder %s83, 0
    %s86 = sadd.s32 %s85, 1
    %s87 = scalar_select %p84, %s85, %s86
    %p90 = pneg %p84
    %p91 = scmp.eq.s32.totalorder %s9, 1
    %p92 = por %p90, %p91
    %p93 = scmp.ne.s32.totalorder %s85, %s88
    %p94 = scmp.eq.s32.totalorder %s9, 0
    %p95 = por %p93, %p94
    %p96 = scmp.ne.s32.totalorder %s85, %s88
    %p97 = scmp.eq.s32.totalorder %s14, 1
    %p98 = por %p96, %p97
    %p99 = scmp.ne.s32.totalorder %s88, %s89
    %p100 = scmp.eq.s32.totalorder %s14, 0
    %p101 = por %p99, %p100
    %p102 = scmp.ne.s32.totalorder %s88, %s89
    %p103 = scmp.eq.s32.totalorder %s15, 1
    %p104 = por %p102, %p103
    %p106 = scmp.ne.s32.totalorder %s89, %s105
    %p107 = scmp.eq.s32.totalorder %s15, 0
    %p108 = por %p106, %p107
    %p109 = scmp.le.s32.totalorder 1, %s9
    %p110 = scmp.lt.s32.totalorder %s9, 3
    %p111 = pnand %p109, %p110
    %p112 = pneg %p111
    // Predicated region
    $region9: #{sse_block_fwd.3} parent=5 // pred_check
      _
    $region10: #{sse_block_fwd.3} parent=5 // pred_check_branch
      %114 = sbr.rel (%p111) target = $region12
    $region11: #{sse_block_fwd.3} parent=5 // pred_region
      %s115 = ssub.s32 %s9, 1
    $region12: #{sse_block_fwd.3} parent=5 // pred_fallthru
      _
    %p116 = scmp.lt.s32.totalorder %s9, 2
    // Predicated region
    $region13: #{sse_block_fwd.3} parent=5 // pred_check
      %p117 = pneg %p116
    $region14: #{sse_block_fwd.3} parent=5 // pred_check_branch
      %119 = sbr.rel (%p117) target = $region16
    $region15: #{sse_block_fwd.3} parent=5 // pred_region
      // Predicated region
      $region17: #{sse_block_fwd.3} parent=15 // pred_check
        %p120 = pneg %p43
      $region18: #{sse_block_fwd.3} parent=15 // pred_check_branch
        %122 = sbr.rel (%p120) target = $region20
      $region19: #{sse_block_fwd.3} parent=15 // pred_region
        %s123 = smul.u32 4, %s17
        %p124 = scmp.lt.s32.totalorder %s16, 1
        %s125 = scalar_select %p124, %s16, 1
        %p126 = scmp.lt.s32.totalorder %s123, 3
        %s127 = scalar_select %p126, %s123, 3
        %s128 = smul.addr %s127, 2
        %s129 = smul.addr %s125, 8
        %s130 = sadd.s32 %s128, %s129
        %s131 = smul.addr %s130, 8
        %s132 = scalar_lea.vmem %s0, %s131
        %s133 = smul.u32 4, %s17
      $region20: #{sse_block_fwd.3} parent=15 // pred_fallthru
        _
    $region16: #{sse_block_fwd.3} parent=5 // pred_fallthru
      _
    %p134 = scmp.le.s32.totalorder 1, %s9
    %p135 = scmp.lt.s32.totalorder %s9, 3
    %p136 = pnand %p134, %p135
    %p137 = pneg %p136
    // Predicated region
    $region21: #{sse_block_fwd.3} parent=5 // pred_check
      _
    $region22: #{sse_block_fwd.3} parent=5 // pred_check_branch
      %139 = sbr.rel (%p136) target = $region24
    $region23: #{sse_block_fwd.3} parent=5 // pred_region
      %s140 = ssub.s32 %s9, 1
      %s141 = smul.u32 4, %s19
      %p142 = scmp.lt.s32.totalorder %s18, 1
      %s143 = scalar_select %p142, %s18, 1
      %p144 = scmp.lt.s32.totalorder %s141, 3
      %s145 = scalar_select %p144, %s141, 3
      %s146 = smul.addr %s145, 2
      %s147 = smul.addr %s143, 8
      %s148 = sadd.s32 %s146, %s147
      %s149 = smul.addr %s148, 8
      %s150 = scalar_lea.vmem %s0, %s149
      %p151 = pneg %p49
      %p152 = pneg %p46
      %p153 = pneg %p75
      %p154 = pneg %p72
      %p155 = scmp.lt.s32.totalorder %s18, 1
      %s156 = scalar_select %p155, %s18, 1
      %s157 = smul.addr %s156, 4
      %s158 = smul.addr %s157, 8
      %s159 = scalar_lea.vmem %s1, %s158
      %p160 = pneg %p101
      %p161 = pneg %p98
      %p162 = scmp.lt.s32.totalorder %s18, 1
      %s163 = scalar_select %p162, %s18, 1
      %s164 = smul.addr %s163, 4
      %s165 = smul.addr %s164, 8
      %s166 = scalar_lea.vmem %s2, %s165
      %s167 = smul.u32 4, %s19
      %p168 = scmp.lt.s32.totalorder %s18, 1
      %s169 = scalar_select %p168, %s18, 1
      %p170 = scmp.lt.s32.totalorder %s167, 3
      %s171 = scalar_select %p170, %s167, 3
      %s172 = smul.addr %s171, 2
      %s173 = smul.addr %s169, 8
      %s174 = sadd.s32 %s172, %s173
      %s175 = smul.addr %s174, 8
      %s176 = scalar_lea.vmem %s0, %s175
      %s177 = smul.u32 4, %s19
      %p178 = scmp.lt.s32.totalorder %s18, 1
      %s179 = scalar_select %p178, %s18, 1
      %s180 = smul.addr %s179, 4
      %s181 = smul.addr %s180, 8
      %s182 = scalar_lea.vmem %s1, %s181
      %p183 = scmp.lt.s32.totalorder %s18, 1
      %s184 = scalar_select %p183, %s18, 1
      %s185 = smul.addr %s184, 4
      %s186 = smul.addr %s185, 8
      %s187 = scalar_lea.vmem %s2, %s186
      %p188 = scmp.eq.s32.totalorder %s19, 0
      // Predicated region
      $region25: #{sse_block_fwd.3} parent=23 // pred_check
        %p189 = pneg %p188
      $region26: #{sse_block_fwd.3} parent=23 // pred_check_branch
        %191 = sbr.rel (%p189) target = $region28
      $region27: #{sse_block_fwd.3} parent=23 // pred_region
        %vm192 = vcmask 7168
        %193 = vst.msk [vmem:[%s182] sm:$0xff] %vm192, 0.0
        %194 = vst.msk [vmem:[%s182 + $0x8] sm:$0xff] %vm192, 0.0
        %195 = vst.msk [vmem:[%s182 + $0x10] sm:$0xff] %vm192, 0.0
        %196 = vst.msk [vmem:[%s182 + $0x18] sm:$0xff] %vm192, 0.0
        %197 = vst.msk [vmem:[%s187] sm:$0xff] %vm192, 0.0
        %198 = vst.msk [vmem:[%s187 + $0x8] sm:$0xff] %vm192, 0.0
        %199 = vst.msk [vmem:[%s187 + $0x10] sm:$0xff] %vm192, 0.0
        %200 = vst.msk [vmem:[%s187 + $0x18] sm:$0xff] %vm192, 0.0
      $region28: #{sse_block_fwd.3} parent=23 // pred_fallthru
        _
      %v201 = vld [vmem:[%s176] sm:$0xff]
      %v202 = vld [vmem:[%s176 + $0x8] sm:$0xff]
      %v203 = vld [vmem:[%s176 + $0x10] sm:$0xff]
      %v204 = vld [vmem:[%s176 + $0x18] sm:$0xff]
      %v205 = vld [vmem:[%s176 + $0x20] sm:$0xff]
      %v206 = vld [vmem:[%s176 + $0x28] sm:$0xff]
      %v207 = vld [vmem:[%s176 + $0x30] sm:$0xff]
      %v208 = vld [vmem:[%s176 + $0x38] sm:$0xff]
      %v209 = vld [vmem:[%s182] sm:$0xff]
      %v210 = vld [vmem:[%s182 + $0x8] sm:$0xff]
      %v211 = vld [vmem:[%s182 + $0x10] sm:$0xff]
      %v212 = vld [vmem:[%s182 + $0x18] sm:$0xff]
      %v213 = vadd.f32 %v201, %v202
      %214 = vadd.xlane.f32.xlu0 %v213
      %v215 = vpop.xlane.xlu0 %214
      %v216 = vadd.f32 %v203, %v204
      %217 = vadd.xlane.f32.xlu0 %v216
      %v218 = vpop.xlane.xlu0 %217
      %v219 = vadd.f32 %v205, %v206
      %220 = vadd.xlane.f32.xlu0 %v219
      %v221 = vpop.xlane.xlu0 %220
      %v222 = vadd.f32 %v207, %v208
      %223 = vadd.xlane.f32.xlu0 %v222
      %v224 = vpop.xlane.xlu0 %223
      %v225 = vadd.f32 %v209, %v215
      %v226 = vadd.f32 %v210, %v218
      %v227 = vadd.f32 %v211, %v221
      %v228 = vadd.f32 %v212, %v224
      %vm229 = vcmask 7168
      %230 = vst.msk [vmem:[%s182] sm:$0xff] %vm229, %v225
      %231 = vst.msk [vmem:[%s182 + $0x8] sm:$0xff] %vm229, %v226
      %232 = vst.msk [vmem:[%s182 + $0x10] sm:$0xff] %vm229, %v227
      %233 = vst.msk [vmem:[%s182 + $0x18] sm:$0xff] %vm229, %v228
      %v234 = vld [vmem:[%s187] sm:$0xff]
      %v235 = vld [vmem:[%s187 + $0x8] sm:$0xff]
      %v236 = vld [vmem:[%s187 + $0x10] sm:$0xff]
      %v237 = vld [vmem:[%s187 + $0x18] sm:$0xff]
      %v238 = vmul.f32 %v201, %v201
      %v239 = vmul.f32 %v202, %v202
      %v240 = vmul.f32 %v203, %v203
      %v241 = vmul.f32 %v204, %v204
      %v242 = vmul.f32 %v205, %v205
      %v243 = vmul.f32 %v206, %v206
      %v244 = vmul.f32 %v207, %v207
      %v245 = vmul.f32 %v208, %v208
      %v246 = vadd.f32 %v238, %v239
      %247 = vadd.xlane.f32.xlu0 %v246
      %v248 = vpop.xlane.xlu0 %247
      %v249 = vadd.f32 %v240, %v241
      %250 = vadd.xlane.f32.xlu0 %v249
      %v251 = vpop.xlane.xlu0 %250
      %v252 = vadd.f32 %v242, %v243
      %253 = vadd.xlane.f32.xlu0 %v252
      %v254 = vpop.xlane.xlu0 %253
      %v255 = vadd.f32 %v244, %v245
      %256 = vadd.xlane.f32.xlu0 %v255
      %v257 = vpop.xlane.xlu0 %256
      %v258 = vadd.f32 %v234, %v248
      %v259 = vadd.f32 %v235, %v251
      %v260 = vadd.f32 %v236, %v254
      %v261 = vadd.f32 %v237, %v257
      %262 = vst.msk [vmem:[%s187] sm:$0xff] %vm229, %v258
      %263 = vst.msk [vmem:[%s187 + $0x8] sm:$0xff] %vm229, %v259
      %264 = vst.msk [vmem:[%s187 + $0x10] sm:$0xff] %vm229, %v260
      %265 = vst.msk [vmem:[%s187 + $0x18] sm:$0xff] %vm229, %v261
      %p266 = scmp.lt.s32.totalorder %s18, 1
      %s267 = scalar_select %p266, %s18, 1
      %s268 = smul.addr %s267, 4
      %s269 = smul.addr %s268, 8
      %s270 = scalar_lea.vmem %s1, %s269
      %p271 = scmp.lt.s32.totalorder %s18, 1
      %s272 = scalar_select %p271, %s18, 1
      %s273 = smul.addr %s272, 4
      %s274 = smul.addr %s273, 8
      %s275 = scalar_lea.vmem %s2, %s274
      // Predicated region
      $region29: #{sse_block_fwd.3} parent=23 // pred_check
        %p276 = pneg %p72
      $region30: #{sse_block_fwd.3} parent=23 // pred_check_branch
        %278 = sbr.rel (%p276) target = $region32
      $region31: #{sse_block_fwd.3} parent=23 // pred_region
        _
      $region32: #{sse_block_fwd.3} parent=23 // pred_fallthru
        _
      // Predicated region
      $region33: #{sse_block_fwd.3} parent=23 // pred_check
        %p279 = pneg %p98
      $region34: #{sse_block_fwd.3} parent=23 // pred_check_branch
        %281 = sbr.rel (%p279) target = $region36
      $region35: #{sse_block_fwd.3} parent=23 // pred_region
        _
      $region36: #{sse_block_fwd.3} parent=23 // pred_fallthru
        _
    $region24: #{sse_block_fwd.3} parent=5 // pred_fallthru
      _
    %p282 = scmp.le.s32.totalorder 2, %s9
    // Predicated region
    $region37: #{sse_block_fwd.3} parent=5 // pred_check
      %p283 = pneg %p282
    $region38: #{sse_block_fwd.3} parent=5 // pred_check_branch
      %285 = sbr.rel (%p283) target = $region40
    $region39: #{sse_block_fwd.3} parent=5 // pred_region
      %s286 = ssub.s32 %s9, 2
      // Predicated region
      $region41: #{sse_block_fwd.3} parent=39 // pred_check
        %p287 = pneg %p78
      $region42: #{sse_block_fwd.3} parent=39 // pred_check_branch
        %289 = sbr.rel (%p287) target = $region44
      $region43: #{sse_block_fwd.3} parent=39 // pred_region
        %p290 = scmp.lt.s32.totalorder %s20, 1
        %s291 = scalar_select %p290, %s20, 1
        %s292 = smul.addr %s291, 4
        %s293 = smul.addr %s292, 8
        %s294 = scalar_lea.vmem %s1, %s293
      $region44: #{sse_block_fwd.3} parent=39 // pred_fallthru
        _
      // Predicated region
      $region45: #{sse_block_fwd.3} parent=39 // pred_check
        %p295 = pneg %p104
      $region46: #{sse_block_fwd.3} parent=39 // pred_check_branch
        %297 = sbr.rel (%p295) target = $region48
      $region47: #{sse_block_fwd.3} parent=39 // pred_region
        %p298 = scmp.lt.s32.totalorder %s20, 1
        %s299 = scalar_select %p298, %s20, 1
        %s300 = smul.addr %s299, 4
        %s301 = smul.addr %s300, 8
        %s302 = scalar_lea.vmem %s2, %s301
      $region48: #{sse_block_fwd.3} parent=39 // pred_fallthru
        _
    $region40: #{sse_block_fwd.3} parent=5 // pred_fallthru
      _
  $region6: #{sse_block_fwd.3} parent=0 // loop_footer
    %s13 = sadd.s32 1, %s9
  $region7: #{sse_block_fwd.3} parent=0 // loop_footer_branch
    %8 = sbr.rel target = $region3
  $region8: #{sse_block_fwd.3} parent=0 // loop_exit
    _

// kernel: sse_block_fwd.5
$region0: #{sse_block_fwd.5}
  #allocation0 [shape = 'u32[]', space=smem, size = 0x4, offset = 0x4, fixed_abs, tag = 'smem constant byte address 0x4 - core index']
  #allocation1 [shape = 'u32[144,128]{1,0:T(1,128)}', space=vmem, size = 0x12000, scoped, tag = 'internal scratch']
  %s0 = inlined_call_operand.vmem [shape: f32[2,32,256], index: 0, kind: input, shape index: {}]
  %s1 = inlined_call_operand.vmem [shape: f32[2,32,1], index: 1, kind: input, shape index: {}]
  %s2 = inlined_call_operand.vmem [shape: f32[2,32,1], index: 2, kind: input, shape index: {}]
  %s3 = inlined_call_operand.vmem [shape: f32[2,32,256], index: 3, kind: output, shape index: {}]
  %s4 = sld [smem:[#allocation0]]
  $region45: #{sse_block_fwd.5} parent=0
    _
  %s6 = ssub.s32 1, %s4
  %s7 = scalar_select 0, %s6, %s4
  loop: start=0, step=1, limit=4
  $region2: #{sse_block_fwd.5} parent=0 // loop_pre_header
    _
  $region3: #{sse_block_fwd.5} parent=0 // loop_header
    %s9 = sphi 0, %s13
    %p10 = scmp.ge.s32.totalorder %s9, 4
    %s16 = sphi 0, %s28
    %s17 = sphi 0, %s24
    %s18 = sphi 0, %s16
    %s19 = sphi 0, %s17
    %s20 = sphi 0, %s18
    %s21 = sphi 0, %s19
    %s33 = sphi 0, %s35
    %s36 = sphi 0, %s33
    %s37 = sphi 0, %s36
    %s53 = sphi 0, %s37
    %s59 = sphi 0, %s61
    %s62 = sphi 0, %s59
    %s63 = sphi 0, %s62
    %s79 = sphi 0, %s63
    %s85 = sphi 0, %s87
    %s88 = sphi 0, %s85
    %s89 = sphi 0, %s88
    %s105 = sphi 0, %s89
    %s113 = sphi 0, %s115
    %s116 = sphi 0, %s113
    %s117 = sphi 0, %s116
    %s133 = sphi 0, %s117
  $region4: #{sse_block_fwd.5} parent=0 // loop_header_branch
    %12 = sbr.rel (%p10) target = $region8
  $region5: #{sse_block_fwd.5} parent=0 // loop_body
    %s14 = ssub.s32 %s9, 1
    %s15 = ssub.s32 %s9, 2
    %s22 = sadd.s32 1, %s17
    %p23 = scmp.ge.s32.totalorder %s22, 1
    %s24 = scalar_select %p23, 0, %s22
    %s25 = sadd.s32 1, %s16
    %s26 = scalar_select %p23, %s25, %s16
    %p27 = scmp.ge.s32.totalorder %s26, 2
    %s28 = scalar_select %p27, 0, %s26
    %s29 = ssub.s32 %s16, %s28
    %s30 = ssub.s32 %s17, %s24
    %s31 = sor.u32 %s29, %s30
    %p32 = scmp.eq.s32.totalorder %s31, 0
    %s34 = sadd.s32 %s33, 1
    %s35 = scalar_select %p32, %s33, %s34
    %p38 = pneg %p32
    %p39 = scmp.eq.s32.totalorder %s9, 1
    %p40 = por %p38, %p39
    %p41 = scmp.ne.s32.totalorder %s33, %s36
    %p42 = scmp.eq.s32.totalorder %s9, 0
    %p43 = por %p41, %p42
    %p44 = scmp.ne.s32.totalorder %s33, %s36
    %p45 = scmp.eq.s32.totalorder %s14, 1
    %p46 = por %p44, %p45
    %p47 = scmp.ne.s32.totalorder %s36, %s37
    %p48 = scmp.eq.s32.totalorder %s14, 0
    %p49 = por %p47, %p48
    %p50 = scmp.ne.s32.totalorder %s36, %s37
    %p51 = scmp.eq.s32.totalorder %s15, 1
    %p52 = por %p50, %p51
    %p54 = scmp.ne.s32.totalorder %s37, %s53
    %p55 = scmp.eq.s32.totalorder %s15, 0
    %p56 = por %p54, %p55
    %s57 = ssub.s32 %s16, %s28
    %p58 = scmp.eq.s32.totalorder %s57, 0
    %s60 = sadd.s32 %s59, 1
    %s61 = scalar_select %p58, %s59, %s60
    %p64 = pneg %p58
    %p65 = scmp.eq.s32.totalorder %s9, 1
    %p66 = por %p64, %p65
    %p67 = scmp.ne.s32.totalorder %s59, %s62
    %p68 = scmp.eq.s32.totalorder %s9, 0
    %p69 = por %p67, %p68
    %p70 = scmp.ne.s32.totalorder %s59, %s62
    %p71 = scmp.eq.s32.totalorder %s14, 1
    %p72 = por %p70, %p71
    %p73 = scmp.ne.s32.totalorder %s62, %s63
    %p74 = scmp.eq.s32.totalorder %s14, 0
    %p75 = por %p73, %p74
    %p76 = scmp.ne.s32.totalorder %s62, %s63
    %p77 = scmp.eq.s32.totalorder %s15, 1
    %p78 = por %p76, %p77
    %p80 = scmp.ne.s32.totalorder %s63, %s79
    %p81 = scmp.eq.s32.totalorder %s15, 0
    %p82 = por %p80, %p81
    %s83 = ssub.s32 %s16, %s28
    %p84 = scmp.eq.s32.totalorder %s83, 0
    %s86 = sadd.s32 %s85, 1
    %s87 = scalar_select %p84, %s85, %s86
    %p90 = pneg %p84
    %p91 = scmp.eq.s32.totalorder %s9, 1
    %p92 = por %p90, %p91
    %p93 = scmp.ne.s32.totalorder %s85, %s88
    %p94 = scmp.eq.s32.totalorder %s9, 0
    %p95 = por %p93, %p94
    %p96 = scmp.ne.s32.totalorder %s85, %s88
    %p97 = scmp.eq.s32.totalorder %s14, 1
    %p98 = por %p96, %p97
    %p99 = scmp.ne.s32.totalorder %s88, %s89
    %p100 = scmp.eq.s32.totalorder %s14, 0
    %p101 = por %p99, %p100
    %p102 = scmp.ne.s32.totalorder %s88, %s89
    %p103 = scmp.eq.s32.totalorder %s15, 1
    %p104 = por %p102, %p103
    %p106 = scmp.ne.s32.totalorder %s89, %s105
    %p107 = scmp.eq.s32.totalorder %s15, 0
    %p108 = por %p106, %p107
    %s109 = ssub.s32 %s16, %s28
    %s110 = ssub.s32 %s17, %s24
    %s111 = sor.u32 %s109, %s110
    %p112 = scmp.eq.s32.totalorder %s111, 0
    %s114 = sadd.s32 %s113, 1
    %s115 = scalar_select %p112, %s113, %s114
    %p118 = pneg %p112
    %p119 = scmp.eq.s32.totalorder %s9, 1
    %p120 = por %p118, %p119
    %p121 = scmp.ne.s32.totalorder %s113, %s116
    %p122 = scmp.eq.s32.totalorder %s9, 0
    %p123 = por %p121, %p122
    %p124 = scmp.ne.s32.totalorder %s113, %s116
    %p125 = scmp.eq.s32.totalorder %s14, 1
    %p126 = por %p124, %p125
    %p127 = scmp.ne.s32.totalorder %s116, %s117
    %p128 = scmp.eq.s32.totalorder %s14, 0
    %p129 = por %p127, %p128
    %p130 = scmp.ne.s32.totalorder %s116, %s117
    %p131 = scmp.eq.s32.totalorder %s15, 1
    %p132 = por %p130, %p131
    %p134 = scmp.ne.s32.totalorder %s117, %s133
    %p135 = scmp.eq.s32.totalorder %s15, 0
    %p136 = por %p134, %p135
    %p137 = scmp.le.s32.totalorder 1, %s9
    %p138 = scmp.lt.s32.totalorder %s9, 3
    %p139 = pnand %p137, %p138
    %p140 = pneg %p139
    // Predicated region
    $region9: #{sse_block_fwd.5} parent=5 // pred_check
      _
    $region10: #{sse_block_fwd.5} parent=5 // pred_check_branch
      %142 = sbr.rel (%p139) target = $region12
    $region11: #{sse_block_fwd.5} parent=5 // pred_region
      %s143 = ssub.s32 %s9, 1
    $region12: #{sse_block_fwd.5} parent=5 // pred_fallthru
      _
    %p144 = scmp.lt.s32.totalorder %s9, 2
    // Predicated region
    $region13: #{sse_block_fwd.5} parent=5 // pred_check
      %p145 = pneg %p144
    $region14: #{sse_block_fwd.5} parent=5 // pred_check_branch
      %147 = sbr.rel (%p145) target = $region16
    $region15: #{sse_block_fwd.5} parent=5 // pred_region
      // Predicated region
      $region17: #{sse_block_fwd.5} parent=15 // pred_check
        %p148 = pneg %p43
      $region18: #{sse_block_fwd.5} parent=15 // pred_check_branch
        %150 = sbr.rel (%p148) target = $region20
      $region19: #{sse_block_fwd.5} parent=15 // pred_region
        %s151 = smul.u32 4, %s17
        %p152 = scmp.lt.s32.totalorder %s16, 1
        %s153 = scalar_select %p152, %s16, 1
        %p154 = scmp.lt.s32.totalorder %s151, 3
        %s155 = scalar_select %p154, %s151, 3
        %s156 = smul.addr %s155, 2
        %s157 = smul.addr %s153, 8
        %s158 = sadd.s32 %s156, %s157
        %s159 = smul.addr %s158, 8
        %s160 = scalar_lea.vmem %s0, %s159
        %s161 = smul.u32 4, %s17
      $region20: #{sse_block_fwd.5} parent=15 // pred_fallthru
        _
      // Predicated region
      $region21: #{sse_block_fwd.5} parent=15 // pred_check
        %p162 = pneg %p69
      $region22: #{sse_block_fwd.5} parent=15 // pred_check_branch
        %164 = sbr.rel (%p162) target = $region24
      $region23: #{sse_block_fwd.5} parent=15 // pred_region
        %p165 = scmp.lt.s32.totalorder %s16, 1
        %s166 = scalar_select %p165, %s16, 1
        %s167 = smul.addr %s166, 4
        %s168 = smul.addr %s167, 8
        %s169 = scalar_lea.vmem %s1, %s168
      $region24: #{sse_block_fwd.5} parent=15 // pred_fallthru
        _
      // Predicated region
      $region25: #{sse_block_fwd.5} parent=15 // pred_check
        %p170 = pneg %p95
      $region26: #{sse_block_fwd.5} parent=15 // pred_check_branch
        %172 = sbr.rel (%p170) target = $region28
      $region27: #{sse_block_fwd.5} parent=15 // pred_region
        %p173 = scmp.lt.s32.totalorder %s16, 1
        %s174 = scalar_select %p173, %s16, 1
        %s175 = smul.addr %s174, 4
        %s176 = smul.addr %s175, 8
        %s177 = scalar_lea.vmem %s2, %s176
      $region28: #{sse_block_fwd.5} parent=15 // pred_fallthru
        _
    $region16: #{sse_block_fwd.5} parent=5 // pred_fallthru
      _
    %p178 = scmp.le.s32.totalorder 1, %s9
    %p179 = scmp.lt.s32.totalorder %s9, 3
    %p180 = pnand %p178, %p179
    %p181 = pneg %p180
    // Predicated region
    $region29: #{sse_block_fwd.5} parent=5 // pred_check
      _
    $region30: #{sse_block_fwd.5} parent=5 // pred_check_branch
      %183 = sbr.rel (%p180) target = $region32
    $region31: #{sse_block_fwd.5} parent=5 // pred_region
      %s184 = ssub.s32 %s9, 1
      %s185 = smul.u32 4, %s19
      %p186 = scmp.lt.s32.totalorder %s18, 1
      %s187 = scalar_select %p186, %s18, 1
      %p188 = scmp.lt.s32.totalorder %s185, 3
      %s189 = scalar_select %p188, %s185, 3
      %s190 = smul.addr %s189, 2
      %s191 = smul.addr %s187, 8
      %s192 = sadd.s32 %s190, %s191
      %s193 = smul.addr %s192, 8
      %s194 = scalar_lea.vmem %s0, %s193
      %p195 = pneg %p49
      %p196 = pneg %p46
      %p197 = scmp.lt.s32.totalorder %s18, 1
      %s198 = scalar_select %p197, %s18, 1
      %s199 = smul.addr %s198, 4
      %s200 = smul.addr %s199, 8
      %s201 = scalar_lea.vmem %s1, %s200
      %p202 = pneg %p75
      %p203 = pneg %p72
      %p204 = scmp.lt.s32.totalorder %s18, 1
      %s205 = scalar_select %p204, %s18, 1
      %s206 = smul.addr %s205, 4
      %s207 = smul.addr %s206, 8
      %s208 = scalar_lea.vmem %s2, %s207
      %p209 = pneg %p101
      %p210 = pneg %p98
      %p211 = pneg %p129
      %p212 = pneg %p126
      %s213 = smul.u32 4, %s19
      %p214 = scmp.lt.s32.totalorder %s18, 1
      %s215 = scalar_select %p214, %s18, 1
      %p216 = scmp.lt.s32.totalorder %s213, 3
      %s217 = scalar_select %p216, %s213, 3
      %s218 = smul.addr %s217, 2
      %s219 = smul.addr %s215, 8
      %s220 = sadd.s32 %s218, %s219
      %s221 = smul.addr %s220, 8
      %s222 = scalar_lea.vmem %s3, %s221
      %s223 = smul.u32 4, %s19
      %p224 = scmp.lt.s32.totalorder %s18, 1
      %s225 = scalar_select %p224, %s18, 1
      %p226 = scmp.lt.s32.totalorder %s223, 3
      %s227 = scalar_select %p226, %s223, 3
      %s228 = smul.addr %s227, 2
      %s229 = smul.addr %s225, 8
      %s230 = sadd.s32 %s228, %s229
      %s231 = smul.addr %s230, 8
      %s232 = scalar_lea.vmem %s0, %s231
      %s233 = smul.u32 4, %s19
      %p234 = scmp.lt.s32.totalorder %s18, 1
      %s235 = scalar_select %p234, %s18, 1
      %s236 = smul.addr %s235, 4
      %s237 = smul.addr %s236, 8
      %s238 = scalar_lea.vmem %s1, %s237
      %p239 = scmp.lt.s32.totalorder %s18, 1
      %s240 = scalar_select %p239, %s18, 1
      %s241 = smul.addr %s240, 4
      %s242 = smul.addr %s241, 8
      %s243 = scalar_lea.vmem %s2, %s242
      %s244 = smul.u32 4, %s19
      %p245 = scmp.lt.s32.totalorder %s18, 1
      %s246 = scalar_select %p245, %s18, 1
      %p247 = scmp.lt.s32.totalorder %s244, 3
      %s248 = scalar_select %p247, %s244, 3
      %s249 = smul.addr %s248, 2
      %s250 = smul.addr %s246, 8
      %s251 = sadd.s32 %s249, %s250
      %s252 = smul.addr %s251, 8
      %s253 = scalar_lea.vmem %s3, %s252
      %s254 = smul.u32 4, %s19
      %v255 = vld [vmem:[%s232] sm:$0xff]
      %v256 = vld [vmem:[%s232 + $0x8] sm:$0xff]
      %v257 = vld [vmem:[%s232 + $0x10] sm:$0xff]
      %v258 = vld [vmem:[%s232 + $0x18] sm:$0xff]
      %v259 = vld [vmem:[%s232 + $0x20] sm:$0xff]
      %v260 = vld [vmem:[%s232 + $0x28] sm:$0xff]
      %v261 = vld [vmem:[%s232 + $0x30] sm:$0xff]
      %v262 = vld [vmem:[%s232 + $0x38] sm:$0xff]
      %v263 = vld [vmem:[%s238] sm:$0xff]
      %v264 = vld [vmem:[%s238 + $0x8] sm:$0xff]
      %v265 = vld [vmem:[%s238 + $0x10] sm:$0xff]
      %v266 = vld [vmem:[%s238 + $0x18] sm:$0xff]
      %268 = vset.pattern.permute.xlu0 0
      %269 = vperm.xlu0 %268, %v263
      %v270 = vpop.permute.xlu0 %269
      %273 = vset.pattern.permute.xlu0 0
      %274 = vperm.xlu0 %273, %v264
      %v275 = vpop.permute.xlu0 %274
      %278 = vset.pattern.permute.xlu0 0
      %279 = vperm.xlu0 %278, %v265
      %v280 = vpop.permute.xlu0 %279
      %283 = vset.pattern.permute.xlu0 0
      %284 = vperm.xlu0 %283, %v266
      %v285 = vpop.permute.xlu0 %284
      %v287 = vmul.f32 %v255, %v270
      %v288 = vmul.f32 %v256, %v270
      %v289 = vmul.f32 %v257, %v275
      %v290 = vmul.f32 %v258, %v275
      %v291 = vmul.f32 %v259, %v280
      %v292 = vmul.f32 %v260, %v280
      %v293 = vmul.f32 %v261, %v285
      %v294 = vmul.f32 %v262, %v285
      %v295 = vld [vmem:[%s243] sm:$0xff]
      %v296 = vld [vmem:[%s243 + $0x8] sm:$0xff]
      %v297 = vld [vmem:[%s243 + $0x10] sm:$0xff]
      %v298 = vld [vmem:[%s243 + $0x18] sm:$0xff]
      %300 = vset.pattern.permute.xlu0 0
      %301 = vperm.xlu0 %300, %v295
      %v302 = vpop.permute.xlu0 %301
      %305 = vset.pattern.permute.xlu0 0
      %306 = vperm.xlu0 %305, %v296
      %v307 = vpop.permute.xlu0 %306
      %310 = vset.pattern.permute.xlu0 0
      %311 = vperm.xlu0 %310, %v297
      %v312 = vpop.permute.xlu0 %311
      %315 = vset.pattern.permute.xlu0 0
      %316 = vperm.xlu0 %315, %v298
      %v317 = vpop.permute.xlu0 %316
      %v319 = vadd.f32 %v287, %v302
      %v320 = vadd.f32 %v288, %v302
      %v321 = vadd.f32 %v289, %v307
      %v322 = vadd.f32 %v290, %v307
      %v323 = vadd.f32 %v291, %v312
      %v324 = vadd.f32 %v292, %v312
      %v325 = vadd.f32 %v293, %v317
      %v326 = vadd.f32 %v294, %v317
      %327 = vst [vmem:[%s253] sm:$0xff] %v319
      %328 = vst [vmem:[%s253 + $0x8] sm:$0xff] %v320
      %329 = vst [vmem:[%s253 + $0x10] sm:$0xff] %v321
      %330 = vst [vmem:[%s253 + $0x18] sm:$0xff] %v322
      %331 = vst [vmem:[%s253 + $0x20] sm:$0xff] %v323
      %332 = vst [vmem:[%s253 + $0x28] sm:$0xff] %v324
      %333 = vst [vmem:[%s253 + $0x30] sm:$0xff] %v325
      %334 = vst [vmem:[%s253 + $0x38] sm:$0xff] %v326
      %s335 = smul.u32 4, %s19
      %p336 = scmp.lt.s32.totalorder %s18, 1
      %s337 = scalar_select %p336, %s18, 1
      %p338 = scmp.lt.s32.totalorder %s335, 3
      %s339 = scalar_select %p338, %s335, 3
      %s340 = smul.addr %s339, 2
      %s341 = smul.addr %s337, 8
      %s342 = sadd.s32 %s340, %s341
      %s343 = smul.addr %s342, 8
      %s344 = scalar_lea.vmem %s3, %s343
      // Predicated region
      $region33: #{sse_block_fwd.5} parent=31 // pred_check
        %p345 = pneg %p126
      $region34: #{sse_block_fwd.5} parent=31 // pred_check_branch
        %347 = sbr.rel (%p345) target = $region36
      $region35: #{sse_block_fwd.5} parent=31 // pred_region
        %s348 = smul.u32 4, %s19
      $region36: #{sse_block_fwd.5} parent=31 // pred_fallthru
        _
    $region32: #{sse_block_fwd.5} parent=5 // pred_fallthru
      _
    %p349 = scmp.le.s32.totalorder 2, %s9
    // Predicated region
    $region37: #{sse_block_fwd.5} parent=5 // pred_check
      %p350 = pneg %p349
    $region38: #{sse_block_fwd.5} parent=5 // pred_check_branch
      %352 = sbr.rel (%p350) target = $region40
    $region39: #{sse_block_fwd.5} parent=5 // pred_region
      %s353 = ssub.s32 %s9, 2
      // Predicated region
      $region41: #{sse_block_fwd.5} parent=39 // pred_check
        %p354 = pneg %p132
      $region42: #{sse_block_fwd.5} parent=39 // pred_check_branch
        %356 = sbr.rel (%p354) target = $region44
      $region43: #{sse_block_fwd.5} parent=39 // pred_region
        %s357 = smul.u32 4, %s21
        %p358 = scmp.lt.s32.totalorder %s20, 1
        %s359 = scalar_select %p358, %s20, 1
        %p360 = scmp.lt.s32.totalorder %s357, 3
        %s361 = scalar_select %p360, %s357, 3
        %s362 = smul.addr %s361, 2
        %s363 = smul.addr %s359, 8
        %s364 = sadd.s32 %s362, %s363
        %s365 = smul.addr %s364, 8
        %s366 = scalar_lea.vmem %s3, %s365
      $region44: #{sse_block_fwd.5} parent=39 // pred_fallthru
        _
    $region40: #{sse_block_fwd.5} parent=5 // pred_fallthru
      _
  $region6: #{sse_block_fwd.5} parent=0 // loop_footer
    %s13 = sadd.s32 1, %s9
  $region7: #{sse_block_fwd.5} parent=0 // loop_footer_branch
    %8 = sbr.rel target = $region3
  $region8: #{sse_block_fwd.5} parent=0 // loop_exit
    _

// kernel: sse_block_fwd.4
$region0: #{sse_block_fwd.4}
  #allocation0 [shape = 'u32[]', space=smem, size = 0x4, offset = 0x4, fixed_abs, tag = 'smem constant byte address 0x4 - core index']
  #allocation1 [shape = 'u32[144,128]{1,0:T(1,128)}', space=vmem, size = 0x12000, scoped, tag = 'internal scratch']
  %s0 = inlined_call_operand.vmem [shape: f32[2,32], index: 0, kind: input, shape index: {}]
  %s1 = inlined_call_operand.vmem [shape: f32[2,32], index: 1, kind: input, shape index: {}]
  %s2 = inlined_call_operand.vmem [shape: f32[32,32], index: 2, kind: input, shape index: {}]
  %s3 = inlined_call_operand.vmem [shape: f32[1,32], index: 3, kind: input, shape index: {}]
  %s4 = inlined_call_operand.vmem [shape: f32[1,32], index: 4, kind: input, shape index: {}]
  %s5 = inlined_call_operand.vmem [shape: f32[1,32], index: 5, kind: input, shape index: {}]
  %s6 = inlined_call_operand.vmem [shape: f32[1,32], index: 6, kind: input, shape index: {}]
  %s7 = inlined_call_operand.vmem [shape: f32[2,32], index: 7, kind: output, shape index: {0}]
  %s8 = inlined_call_operand.vmem [shape: f32[2,32], index: 8, kind: output, shape index: {1}]
  %9 = xla_tuple %s7, %s8
  %s10 = sld [smem:[#allocation0]]
  $region46: #{sse_block_fwd.4} parent=0
    _
  %s12 = ssub.s32 1, %s10
  %s13 = scalar_select 0, %s12, %s10
  // Predicated region
  $region2: #{sse_block_fwd.4} parent=0 // pred_check
    _
  $region3: #{sse_block_fwd.4} parent=0 // pred_check_branch
    %15 = sbr.rel (0) target = $region5
  $region4: #{sse_block_fwd.4} parent=0 // pred_region
    _
  $region5: #{sse_block_fwd.4} parent=0 // pred_fallthru
    _
  // Predicated region
  $region6: #{sse_block_fwd.4} parent=0 // pred_check
    _
  $region7: #{sse_block_fwd.4} parent=0 // pred_check_branch
    %17 = sbr.rel (0) target = $region9
  $region8: #{sse_block_fwd.4} parent=0 // pred_region
    _
  $region9: #{sse_block_fwd.4} parent=0 // pred_fallthru
    _
  // Predicated region
  $region10: #{sse_block_fwd.4} parent=0 // pred_check
    _
  $region11: #{sse_block_fwd.4} parent=0 // pred_check_branch
    %19 = sbr.rel (0) target = $region13
  $region12: #{sse_block_fwd.4} parent=0 // pred_region
    _
  $region13: #{sse_block_fwd.4} parent=0 // pred_fallthru
    _
  // Predicated region
  $region14: #{sse_block_fwd.4} parent=0 // pred_check
    _
  $region15: #{sse_block_fwd.4} parent=0 // pred_check_branch
    %21 = sbr.rel (0) target = $region17
  $region16: #{sse_block_fwd.4} parent=0 // pred_region
    _
  $region17: #{sse_block_fwd.4} parent=0 // pred_fallthru
    _
  // Predicated region
  $region18: #{sse_block_fwd.4} parent=0 // pred_check
    _
  $region19: #{sse_block_fwd.4} parent=0 // pred_check_branch
    %23 = sbr.rel (0) target = $region21
  $region20: #{sse_block_fwd.4} parent=0 // pred_region
    _
  $region21: #{sse_block_fwd.4} parent=0 // pred_fallthru
    _
  // Predicated region
  $region22: #{sse_block_fwd.4} parent=0 // pred_check
    _
  $region23: #{sse_block_fwd.4} parent=0 // pred_check_branch
    %25 = sbr.rel (0) target = $region25
  $region24: #{sse_block_fwd.4} parent=0 // pred_region
    _
  $region25: #{sse_block_fwd.4} parent=0 // pred_fallthru
    _
  // Predicated region
  $region26: #{sse_block_fwd.4} parent=0 // pred_check
    _
  $region27: #{sse_block_fwd.4} parent=0 // pred_check_branch
    %27 = sbr.rel (0) target = $region29
  $region28: #{sse_block_fwd.4} parent=0 // pred_region
    _
  $region29: #{sse_block_fwd.4} parent=0 // pred_fallthru
    _
  %v28 = vld [vmem:[%s0] sm:$0x3]
  %v29 = vld [vmem:[%s1] sm:$0x3]
  %v30 = vmul.f32 %v28, 0.00390625
  %v31 = vld [vmem:[%s2] sm:$0xff]
  %v32 = vld [vmem:[%s2 + $0x8] sm:$0xff]
  %v33 = vld [vmem:[%s2 + $0x10] sm:$0xff]
  %v34 = vld [vmem:[%s2 + $0x18] sm:$0xff]
  %vm35 = vcmask 261120
  %v37 = vsel %vm35, %v30, 0
  %39 = vmatprep.subr.mxu0 0.0
  %40 = vmatpush1.msra.mxu0 0.0
  %41 = vmatprep.subr.mxu0 0.0
  %42 = vmatpush1.msra.mxu0 0.0
  %43 = vmatprep.subr.mxu0 0.0
  %44 = vmatpush1.msra.mxu0 0.0
  %45 = vmatprep.subr.mxu0 0.0
  %46 = vmatpush1.msra.mxu0 0.0
  %47 = vmatprep.subr.mxu0 0.0
  %48 = vmatpush1.msra.mxu0 0.0
  %49 = vmatprep.subr.mxu0 0.0
  %50 = vmatpush1.msra.mxu0 0.0
  %51 = vmatprep.subr.mxu0 0.0
  %52 = vmatpush1.msra.mxu0 0.0
  %53 = vmatprep.subr.mxu0 0.0
  %54 = vmatpush1.msra.mxu0 0.0
  %55 = vmatprep.subr.mxu0 0.0
  %56 = vmatpush1.msra.mxu0 0.0
  %57 = vmatprep.subr.mxu0 0.0
  %58 = vmatpush1.msra.mxu0 0.0
  %59 = vmatprep.subr.mxu0 0.0
  %60 = vmatpush1.msra.mxu0 0.0
  %61 = vmatprep.subr.mxu0 0.0
  %62 = vmatpush1.msra.mxu0 0.0
  %63 = vmatprep.subr.mxu0 0.0
  %64 = vmatpush1.msra.mxu0 %v34
  %65 = vmatprep.subr.mxu0 0.0
  %66 = vmatpush1.msra.mxu0 %v33
  %67 = vmatprep.subr.mxu0 0.0
  %68 = vmatpush1.msra.mxu0 %v32
  %69 = vmatprep.subr.mxu0 0.0
  %70 = vmatpush1.msra.mxu0 %v31
  %71 = vmatprep.subr.mxu0 0.0
  %72 = vmatpush2.msra.mxu0 0.0
  %73 = vmatprep.subr.mxu0 0.0
  %74 = vmatpush2.msra.mxu0 0.0
  %75 = vmatprep.subr.mxu0 0.0
  %76 = vmatpush2.msra.mxu0 0.0
  %77 = vmatprep.subr.mxu0 0.0
  %78 = vmatpush2.msra.mxu0 0.0
  %79 = vmatprep.subr.mxu0 0.0
  %80 = vmatpush2.msra.mxu0 0.0
  %81 = vmatprep.subr.mxu0 0.0
  %82 = vmatpush2.msra.mxu0 0.0
  %83 = vmatprep.subr.mxu0 0.0
  %84 = vmatpush2.msra.mxu0 0.0
  %85 = vmatprep.subr.mxu0 0.0
  %86 = vmatpush2.msra.mxu0 0.0
  %87 = vmatprep.subr.mxu0 0.0
  %88 = vmatpush2.msra.mxu0 0.0
  %89 = vmatprep.subr.mxu0 0.0
  %90 = vmatpush2.msra.mxu0 0.0
  %91 = vmatprep.subr.mxu0 0.0
  %92 = vmatpush2.msra.mxu0 0.0
  %93 = vmatprep.subr.mxu0 0.0
  %94 = vmatpush2.msra.mxu0 0.0
  %95 = vmatprep.subr.mxu0 0.0
  %96 = vmatpush2.msra.mxu0 0.0
  %97 = vmatprep.subr.mxu0 0.0
  %98 = vmatpush2.msra.mxu0 0.0
  %99 = vmatprep.subr.mxu0 0.0
  %100 = vmatpush2.msra.mxu0 0.0
  %101 = vmatprep.subr.mxu0 0.0
  %102 = vmatpush2.msra.mxu0 0.0
  %103 = vmatprep.mubr.f32.mxu0 0.0
  %104 = vmatmul.mubr.f32.gmra.mxu0 %v37
  %v105 = vpop.f32.mrf.mxu0
  %v106 = vadd.f32 0.0, %v105
  %v107 = vpop.f32.mrf.mxu0
  %108 = vdwg.mxu0
  %v109 = vxor.u32 %v106, 2147483648
  %v110 = vmul.f32 %v109, 1.442695
  %v111 = vpow.pop %v110
  %v112 = vadd.f32 %v111, 1.0
  %v113 = vrcp.pop %v112
  %v114 = vmul.f32 1.0, %v113
  %vm115 = vcmask 254976
  %v116 = vsel %vm115, %v28, 0.0
  %v117 = vrot.slane %v116, 4
  %v118 = vadd.f32 %v116, %v117
  %v119 = vrot.slane %v118, 2
  %v120 = vadd.f32 %v118, %v119
  %v121 = vrot.slane %v120, 1
  %v122 = vadd.f32 %v120, %v121
  %v123 = vmul.f32 %v122, 0.001953125
  %v124 = vsel %vm115, %v29, 0.0
  %v125 = vrot.slane %v124, 4
  %v126 = vadd.f32 %v124, %v125
  %v127 = vrot.slane %v126, 2
  %v128 = vadd.f32 %v126, %v127
  %v129 = vrot.slane %v128, 1
  %v130 = vadd.f32 %v128, %v129
  %v131 = vmul.f32 %v130, 0.001953125
  %v132 = vmul.f32 %v123, %v123
  %v133 = vsub.f32 %v131, %v132
  %v134 = vld [vmem:[%s3] sm:$0x1]
  %v135 = vadd.f32 %v133, 1e-05
  %v136 = vrsqrt.pop %v135
  %v137 = vmul.f32 %v134, %v136
  %v138 = vld [vmem:[%s4] sm:$0x1]
  %v139 = vmul.f32 %v123, %v137
  %v140 = vsub.f32 %v138, %v139
  %v142 = vlaneseq
  %v143 = vshrl.u32 %v142, 7
  %v144 = vsub.s32 0, %v143
  %v145 = vrot.slane %v137, %v144
  %v147 = vmul.f32 %v145, %v114
  %148 = vst.msk [vmem:[%s7] sm:$0x3] %vm115, %v147
  %v150 = vlaneseq
  %v151 = vshrl.u32 %v150, 7
  %v152 = vsub.s32 0, %v151
  %v153 = vrot.slane %v140, %v152
  %v155 = vmul.f32 %v153, %v114
  %156 = vst.msk [vmem:[%s8] sm:$0x3] %vm115, %v155
  // Predicated region
  $region30: #{sse_block_fwd.4} parent=0 // pred_check
    _
  $region31: #{sse_block_fwd.4} parent=0 // pred_check_branch
    %158 = sbr.rel (0) target = $region33
  $region32: #{sse_block_fwd.4} parent=0 // pred_region
    _
  $region33: #{sse_block_fwd.4} parent=0 // pred_fallthru
    _
  // Predicated region
  $region34: #{sse_block_fwd.4} parent=0 // pred_check
    _
  $region35: #{sse_block_fwd.4} parent=0 // pred_check_branch
    %160 = sbr.rel (0) target = $region37
  $region36: #{sse_block_fwd.4} parent=0 // pred_region
    _
  $region37: #{sse_block_fwd.4} parent=0 // pred_fallthru
    _
  // Predicated region
  $region38: #{sse_block_fwd.4} parent=0 // pred_check
    _
  $region39: #{sse_block_fwd.4} parent=0 // pred_check_branch
    %162 = sbr.rel (0) target = $region41
  $region40: #{sse_block_fwd.4} parent=0 // pred_region
    _
  $region41: #{sse_block_fwd.4} parent=0 // pred_fallthru
    _
  // Predicated region
  $region42: #{sse_block_fwd.4} parent=0 // pred_check
    _
  $region43: #{sse_block_fwd.4} parent=0 // pred_check_branch
    %164 = sbr.rel (0) target = $region45
  $region44: #{sse_block_fwd.4} parent=0 // pred_region
    _
  $region45: #{sse_block_fwd.4} parent=0 // pred_fallthru
    _

</llo_original>
